<compile_context>
chip_gen: v7x
topology: tpu7x:2x2x1
jax: 0.10.0
libtpu: 0.0.40
codegen_flags: <defaults>
</compile_context>

<pallas_src>
import math
import jax
import jax.numpy as jnp
from jax.experimental import pallas as pl
from jax.experimental.pallas import tpu as pltpu


def _gwl_kernel(x_ref, w_ref, b_ref, o_ref):
    # x_ref: (tb, C, D) batch-row tile
    # w_ref: (1,  C, D) grid-invariant weights (same block every step)
    # b_ref: (1,  C)    grid-invariant bias
    # o_ref: (tb, C_out) lane-dense output tile (C_out = round_up(C, 128))
    prod = x_ref[...].astype(jnp.float32) * w_ref[...].astype(jnp.float32)
    red = jnp.sum(prod, axis=-1)                      # (tb, C), f32 accumulation
    out = red + b_ref[...].astype(jnp.float32)        # (1, C) broadcasts over tb

    c = out.shape[-1]
    c_out = o_ref.shape[-1]
    if c_out != c:
        # Widen to a full-lane-width slab so the store is an unmasked vst.
        pad = jnp.zeros((out.shape[0], c_out - c), dtype=out.dtype)
        out = jnp.concatenate([out, pad], axis=-1)
    o_ref[...] = out.astype(o_ref.dtype)


def _tensorcores_per_chip():
    """Best-effort TC-per-chip query (v7x=2, else 1). Heuristic only; never
    affects correctness, only the batch-tile clamp."""
    try:
        info = pltpu.get_tpu_info()
    except Exception:
        return 1
    for attr in ("num_tensorcores", "tensorcores_per_chip", "num_cores_per_chip"):
        v = getattr(info, attr, None)
        if isinstance(v, int) and 1 <= v <= 8:
            return v
    return 1


def _choose_tb(tb, B):
    """Sublane-safe batch tile: multiple of 8, or the full batch extent."""
    tb = max(1, int(tb))
    if tb >= B:
        return int(B)
    tb = max(8, (tb // 8) * 8)
    return int(B) if tb >= B else tb


def group_wise_linear(x, W, b, *, tb=None, target_tile_bytes=8 << 20):
    """x: (B, C, D); W: (1, C, D); b: (1, C) -> (B, C)."""
    B, C, D = x.shape
    assert W.shape == (1, C, D) and b.shape == (1, C)

    itemsize = jnp.dtype(x.dtype).itemsize
    row_bytes = C * D * itemsize

    if tb is None:
        # Largest batch tile whose x slab is ~target_tile_bytes (amortizes the
        # ~0.35us/step pipeline overhead with MiB-scale DMAs).
        tb = max(1, target_tile_bytes // row_bytes)
        cores = _tensorcores_per_chip()
        if cores > 1 and B > 1:
            # Multi-TensorCore chip (v7x): keep at least one block per core.
            tb = min(tb, max(8, pl.cdiv(B, cores)))
    tb = _choose_tb(tb, B)

    n_blocks = pl.cdiv(B, tb)          # ragged tail handled by Pallas masking
    C_out = ((C + 127) // 128) * 128   # lane-dense output width

    # Explicit VMEM budget: double-buffered x tile + double-buffered (but
    # re-fetch-free) W/b + double-buffered output tile, with 2x headroom.
    w_bytes = C * D * jnp.dtype(W.dtype).itemsize
    b_bytes = C * jnp.dtype(b.dtype).itemsize
    needed = (2 * tb * row_bytes) + 2 * w_bytes + 2 * b_bytes + 2 * tb * C_out * itemsize
    vmem_limit_bytes = int(min(max(2 * needed, 32 << 20), 56 << 20))

    out_padded = pl.pallas_call(
        _gwl_kernel,
        out_shape=jax.ShapeDtypeStruct((B, C_out), x.dtype),
        grid_spec=pltpu.PrefetchScalarGridSpec(
            num_scalar_prefetch=0,
            grid=(n_blocks,),
            in_specs=[
                # x: tb batch rows per step (last two dims = full array dims).
                pl.BlockSpec((tb, C, D), lambda i: (i, 0, 0)),
                # W, b: same block every step -> fetched once, kept resident.
                pl.BlockSpec((1, C, D), lambda i: (0, 0, 0)),
                pl.BlockSpec((1, C), lambda i: (0, 0)),
            ],
            out_specs=pl.BlockSpec((tb, C_out), lambda i: (i, 0)),
        ),
        compiler_params=pltpu.CompilerParams(
            dimension_semantics=("parallel",),
            vmem_limit_bytes=vmem_limit_bytes,
        ),
    )(x, W, b)

    # Cheap slice of the tiny (B, C_out) result back to (B, C).
    return out_padded if C_out == C else out_padded[:, :C]


if __name__ == "__main__":
    # Small shapes consistent with the module: batch=2, num_class=8, hidden_dim=32
    B, num_class, hidden_dim = 2, 8, 32

    key = jax.random.PRNGKey(0)
    k_w, k_b, k_x = jax.random.split(key, 3)

    # Deterministic init mirroring reset_parameters(): uniform(-stdv, stdv)
    stdv = 1.0 / math.sqrt(hidden_dim)
    W = jax.random.uniform(k_w, (1, num_class, hidden_dim),
                           minval=-stdv, maxval=stdv, dtype=jnp.float32)
    b = jax.random.uniform(k_b, (1, num_class),
                           minval=-stdv, maxval=stdv, dtype=jnp.float32)
    x = jax.random.normal(k_x, (B, num_class, hidden_dim), dtype=jnp.float32)

    out = jax.block_until_ready(group_wise_linear(x, W, b))
    ref = jnp.sum(W * x, axis=-1) + b
    assert out.shape == (B, num_class)
    assert jnp.allclose(out, ref, atol=1e-5, rtol=1e-5), "f32 mismatch vs reference"

    # Multi-block grid with a ragged (masked) tail block: B=20, tb=8 -> blocks 8/8/4.
    B2 = 20
    x2 = jax.random.normal(jax.random.PRNGKey(1), (B2, num_class, hidden_dim),
                           dtype=jnp.float32)
    out2 = jax.block_until_ready(group_wise_linear(x2, W, b, tb=8))
    ref2 = jnp.sum(W * x2, axis=-1) + b
    assert out2.shape == (B2, num_class)
    assert jnp.allclose(out2, ref2, atol=1e-5, rtol=1e-5), "ragged-tail mismatch"

    # bf16 inputs: f32 accumulation inside the kernel, final cast to bf16.
    xb = x.astype(jnp.bfloat16)
    Wb = W.astype(jnp.bfloat16)
    bb = b.astype(jnp.bfloat16)
    out3 = jax.block_until_ready(group_wise_linear(xb, Wb, bb))
    ref3 = (jnp.sum(Wb.astype(jnp.float32) * xb.astype(jnp.float32), axis=-1)
            + bb.astype(jnp.float32)).astype(jnp.bfloat16)
    assert out3.dtype == jnp.bfloat16
    assert jnp.allclose(out3.astype(jnp.float32), ref3.astype(jnp.float32),
                        atol=5e-2, rtol=5e-2), "bf16 mismatch vs reference"

    print("KERNEL_OK")
</pallas_src>

<mosaic_0001>
module attributes {stable_mosaic.version = 11 : i64} {
  func.func @_gwl_kernel(%arg0: i32, %arg1: memref<2x8x32xf32, #tpu.memory_space<vmem>>, %arg2: memref<1x8x32xf32, #tpu.memory_space<vmem>>, %arg3: memref<1x8xf32, #tpu.memory_space<vmem>>, %arg4: memref<2x128xf32, #tpu.memory_space<vmem>>) attributes {dimension_semantics = [#tpu.dimension_semantics<parallel>], iteration_bounds = array<i64: 1>, scalar_prefetch = 0 : i64, scratch_operands = 0 : i64, tpu.core_type = #tpu.core_type<tc>, window_params = [{transform_indices = @transform_0, window_bounds = array<i64: 2, 8, 32>}, {pipeline_mode = #tpu.pipeline_mode<synchronous>, transform_indices = @transform_1, window_bounds = array<i64: 1, 8, 32>}, {pipeline_mode = #tpu.pipeline_mode<synchronous>, transform_indices = @transform_2, window_bounds = array<i64: 1, 8>}, {transform_indices = @transform_3, window_bounds = array<i64: 2, 128>}]} {
    %c0 = arith.constant 0 : index
    %c0_0 = arith.constant 0 : index
    %c0_1 = arith.constant 0 : index
    %0 = vector.load %arg1[%c0, %c0_0, %c0_1] : memref<2x8x32xf32, #tpu.memory_space<vmem>>, vector<2x8x32xf32>
    %c0_2 = arith.constant 0 : index
    %c0_3 = arith.constant 0 : index
    %c0_4 = arith.constant 0 : index
    %1 = vector.load %arg2[%c0_2, %c0_3, %c0_4] : memref<1x8x32xf32, #tpu.memory_space<vmem>>, vector<1x8x32xf32>
    %2 = vector.broadcast %1 : vector<1x8x32xf32> to vector<2x8x32xf32>
    %3 = arith.mulf %0, %2 : vector<2x8x32xf32>
    %cst = arith.constant dense<0.000000e+00> : vector<2x8xf32>
    %4 = vector.multi_reduction <add>, %3, %cst [2] : vector<2x8x32xf32> to vector<2x8xf32>
    %c0_5 = arith.constant 0 : index
    %c0_6 = arith.constant 0 : index
    %5 = vector.load %arg3[%c0_5, %c0_6] : memref<1x8xf32, #tpu.memory_space<vmem>>, vector<1x8xf32>
    %6 = vector.broadcast %5 : vector<1x8xf32> to vector<2x8xf32>
    %7 = arith.addf %4, %6 : vector<2x8xf32>
    %cst_7 = arith.constant 0.000000e+00 : f32
    %8 = vector.broadcast %cst_7 : f32 to vector<2x120xf32>
    %9 = tpu.concatenate %7, %8 in 1 : vector<2x8xf32>, vector<2x120xf32> -> vector<2x128xf32>
    %c0_8 = arith.constant 0 : index
    %c0_9 = arith.constant 0 : index
    %10 = vector.load %arg4[%c0_8, %c0_9] : memref<2x128xf32, #tpu.memory_space<vmem>>, vector<2x128xf32>
    tpu.vector_store %arg4[%c0_8, %c0_9], %9 {strides = array<i32>} : memref<2x128xf32, #tpu.memory_space<vmem>>, vector<2x128xf32>,
    return
  }
  func.func @transform_0(%arg0: i32) -> (i32, i32, i32) {
    %c0_i32 = arith.constant 0 : i32
    %c0_i32_0 = arith.constant 0 : i32
    %c0_i32_1 = arith.constant 0 : i32
    return %arg0, %c0_i32, %c0_i32_0 : i32, i32, i32
  }
  func.func @transform_1(%arg0: i32) -> (i32, i32, i32) {
    %c0_i32 = arith.constant 0 : i32
    %c0_i32_0 = arith.constant 0 : i32
    %c0_i32_1 = arith.constant 0 : i32
    %c0_i32_2 = arith.constant 0 : i32
    return %c0_i32, %c0_i32_0, %c0_i32_1 : i32, i32, i32
  }
  func.func @transform_2(%arg0: i32) -> (i32, i32) {
    %c0_i32 = arith.constant 0 : i32
    %c0_i32_0 = arith.constant 0 : i32
    %c0_i32_1 = arith.constant 0 : i32
    return %c0_i32, %c0_i32_0 : i32, i32
  }
  func.func @transform_3(%arg0: i32) -> (i32, i32) {
    %c0_i32 = arith.constant 0 : i32
    %c0_i32_0 = arith.constant 0 : i32
    return %arg0, %c0_i32 : i32, i32
  }
}

</mosaic_0001>

<llo_original>
// kernel: tpu_custom_call.1
$region0: #{tpu_custom_call.1}
  #allocation0 [shape = 'u32[]', space=smem, size = 0x4, offset = 0x4, fixed_abs, tag = 'smem constant byte address 0x4 - core index']
  #allocation1 [shape = 'u32[144,128]{1,0:T(1,128)}', space=vmem, size = 0x12000, scoped, tag = 'internal scratch']
  %s0 = inlined_call_operand.hbm [shape: f32[2,8,32], index: 0, kind: input, shape index: {}]
  %s1 = inlined_call_operand.hbm [shape: f32[1,8,32], index: 1, kind: input, shape index: {}]
  %s2 = inlined_call_operand.vmem [shape: f32[1,8], index: 2, kind: input, shape index: {}]
  %s3 = inlined_call_operand.hbm [shape: f32[2,128], index: 3, kind: output, shape index: {}]
  %s4 = sld [smem:[#allocation0]]
  $region30: #{tpu_custom_call.1} parent=0
    _
  %s6 = ssub.s32 1, %s4
  %s7 = scalar_select 0, %s6, %s4
  $region1: #{tpu_custom_call.1} parent=0
    #allocation2 [shape = 'u8[8192]{0}', space=vmem, size = 0x2000, scoped, tag = 'input window, operand 0, single buffered']
    #allocation3 [shape = 's32[1]{0}', space=sflag, size = 0x4, scoped, tag = 'scoped memory for tpu_custom_call.1']
    #allocation4 [shape = 's32[1]{0}', space=sflag, size = 0x4, scoped, tag = 'scoped memory for tpu_custom_call.1']
    #allocation5 [shape = 'u8[4096]{0}', space=vmem, size = 0x1000, scoped, tag = 'input window, operand 1, single buffered']
    #allocation6 [shape = 's32[1]{0}', space=sflag, size = 0x4, scoped, tag = 'scoped memory for tpu_custom_call.1']
    #allocation7 [shape = 'u8[1024]{0}', space=vmem, size = 0x400, scoped, tag = 'output window, operand 0, single buffered']
    %8 = vsyncpa [#allocation3], 0
    %9 = vsyncpa [#allocation6], 0
    %10 = vsyncpa [#allocation4], 0
    // Predicated region
    $region2: #{tpu_custom_call.1} parent=1 // pred_check
      _
    $region3: #{tpu_custom_call.1} parent=1 // pred_check_branch
      %12 = sbr.rel (0) target = $region5
    $region4: #{tpu_custom_call.1} parent=1 // pred_region
      %s14 = ssub.s32 256, 256
      %15 = vsyncadd [#allocation3], %s14
      %s16 = sshll.u32 [#allocation2], 4
      %s17 = int_to_ptr.vmem [resolvable:$true] %s16
      %22 = dma.hbm_to_vmem [thread:$0]  %s0, 256, %s17, [#allocation3], 128, 128, 8
    $region5: #{tpu_custom_call.1} parent=1 // pred_fallthru
      _
    // Predicated region
    $region6: #{tpu_custom_call.1} parent=1 // pred_check
      _
    $region7: #{tpu_custom_call.1} parent=1 // pred_check_branch
      %24 = sbr.rel (0) target = $region9
    $region8: #{tpu_custom_call.1} parent=1 // pred_region
      %s26 = ssub.s32 128, 128
      %27 = vsyncadd [#allocation6], %s26
      %s29 = sshll.u32 [#allocation5], 4
      %s30 = int_to_ptr.vmem [resolvable:$true] %s29
      %32 = dma.hbm_to_vmem [thread:$0]  %s1, 128, %s30, [#allocation6]
    $region9: #{tpu_custom_call.1} parent=1 // pred_fallthru
      _
    // Predicated region
    $region10: #{tpu_custom_call.1} parent=1 // pred_check
      _
    $region11: #{tpu_custom_call.1} parent=1 // pred_check_branch
      %34 = sbr.rel (0) target = $region13
    $region12: #{tpu_custom_call.1} parent=1 // pred_region
      _
    $region13: #{tpu_custom_call.1} parent=1 // pred_fallthru
      _
    // Predicated region
    $region14: #{tpu_custom_call.1} parent=1 // pred_check
      _
    $region15: #{tpu_custom_call.1} parent=1 // pred_check_branch
      %36 = sbr.rel (0) target = $region17
    $region16: #{tpu_custom_call.1} parent=1 // pred_region
      %37 = dma.done [#allocation3], 256
    $region17: #{tpu_custom_call.1} parent=1 // pred_fallthru
      _
    // Predicated region
    $region18: #{tpu_custom_call.1} parent=1 // pred_check
      _
    $region19: #{tpu_custom_call.1} parent=1 // pred_check_branch
      %39 = sbr.rel (0) target = $region21
    $region20: #{tpu_custom_call.1} parent=1 // pred_region
      %40 = dma.done [#allocation6], 128
    $region21: #{tpu_custom_call.1} parent=1 // pred_fallthru
      _
    %v41 = vld [vmem:[#allocation2] sm:$0xff]
    %v42 = vld [vmem:[#allocation2 + $0x8] sm:$0xff]
    %v43 = vld [vmem:[#allocation5] sm:$0xff]
    %v44 = vmul.f32 %v41, %v43
    %v45 = vmul.f32 %v42, %v43
    %vm46 = vcmask 261120
    %v47 = vsel %vm46, %v44, 0.0
    %48 = vadd.xlane.f32.xlu0 %v47
    %v49 = vpop.xlane.xlu0 %48
    %v50 = vsel %vm46, %v45, 0.0
    %51 = vadd.xlane.f32.xlu0 %v50
    %v52 = vpop.xlane.xlu0 %51
    %v53 = vld [vmem:[%s2] sm:$0x1]
    %v55 = vlaneseq
    %v56 = vshrl.u32 %v55, 7
    %v57 = vsub.s32 0, %v56
    %v58 = vrot.slane %v53, %v57
    %60 = vbcast.lane.b32.xlu0 %v58, 256
    %v61 = vpop.permute.xlu0 %60
    %v63 = vadd.f32 %v49, %v61
    %v64 = vadd.f32 %v52, %v61
    %67 = vset.pattern.permute.xlu0 0
    %68 = vperm.xlu0 %67, %v63
    %v69 = vpop.permute.xlu0 %68
    %70 = vset.pattern.permute.xlu0 0
    %71 = vperm.xlu0 %70, %v64
    %v72 = vpop.permute.xlu0 %71
    %v73 = vlaneseq
    %v74 = vand.u32 %v73, 127
    %v75 = vlaneseq
    %v76 = vshrl.u32 %v75, 7
    %v77 = vsub.s32 %v74, %v76
    %v78 = vrot.slane %v69, %v77
    %v79 = vlaneseq
    %v80 = vshrl.u32 %v79, 7
    %v81 = vsub.s32 %v74, %v80
    %v82 = vrot.slane %v72, %v81
    %vm83 = vcmask 1041409
    %v84 = vsel %vm83, %v82, %v78
    %vm86 = vcmask 64512
    %v87 = vsel %vm86, %v84, 0.0
    %88 = vst [vmem:[#allocation7] sm:$0x3] %v87
    // Predicated region
    $region22: #{tpu_custom_call.1} parent=1 // pred_check
      _
    $region23: #{tpu_custom_call.1} parent=1 // pred_check_branch
      %90 = sbr.rel (0) target = $region25
    $region24: #{tpu_custom_call.1} parent=1 // pred_region
      %s92 = ssub.s32 32, 32
      %93 = vsyncadd [#allocation4], %s92
      %s95 = sshll.u32 [#allocation7], 4
      %s96 = int_to_ptr.vmem [resolvable:$true] %s95
      %98 = dma.vmem_to_hbm [thread:$0]  %s96, 32, %s3, [#allocation4]
    $region25: #{tpu_custom_call.1} parent=1 // pred_fallthru
      _
    // Predicated region
    $region26: #{tpu_custom_call.1} parent=1 // pred_check
      _
    $region27: #{tpu_custom_call.1} parent=1 // pred_check_branch
      %100 = sbr.rel (0) target = $region29
    $region28: #{tpu_custom_call.1} parent=1 // pred_region
      %101 = dma.done [#allocation4], 32
    $region29: #{tpu_custom_call.1} parent=1 // pred_fallthru
      _
    %102 = vsyncpa [#allocation3], 1
    %103 = vsyncpa [#allocation6], 1
    %104 = vsyncpa [#allocation4], 1

</llo_original>
